<compile_context>
chip_gen: v7x
topology: tpu7x:2x2x1
jax: 0.10.0
libtpu: 0.0.40
codegen_flags: <defaults>
</compile_context>

<pallas_src>
import jax
import jax.numpy as jnp
from jax.experimental import pallas as pl
from jax.experimental.pallas import tpu as pltpu


# ---------------------------------------------------------------------------
# Fused kernel: mean-pool head + grouped cross-entropy (target label 0)
# ---------------------------------------------------------------------------
def _ce_head_kernel(x_ref, w_ref, b_ref, scores_ref, gloss_ref, acc_ref):
    """x_ref      : (TILE_B, G, TILE_S, H)  activation block (bf16/f32)
       w_ref      : (1, 1, H)               classifier weight, pre-scaled by 1/S
       b_ref      : (1,)  SMEM              classifier bias
       scores_ref : (1, TILE_B, G)          logits in the (B, G) "scores" view
       gloss_ref  : (1, TILE_B, 1)          per-group CE loss (target index 0)
       acc_ref    : (TILE_B, G) f32         partial-logit accumulator (VMEM)
    """
    s = pl.program_id(1)

    @pl.when(s == 0)
    def _init():
        acc_ref[...] = jnp.zeros_like(acc_ref)

    # Pool this sequence tile (sublane reduce, XLU) then contract with the
    # pre-scaled weight (VPU multiply + lane reduce).  The accumulator holds
    # one f32 partial logit per (b, g) pair -- no H-wide scratch traffic.
    x = x_ref[...].astype(jnp.float32)                       # (TB, G, TS, H)
    pooled = jnp.sum(x, axis=2)                              # (TB, G, H)
    w = w_ref[...].astype(jnp.float32)                       # (1, 1, H)
    acc_ref[...] += jnp.sum(pooled * w, axis=-1)             # (TB, G)

    @pl.when(s == pl.num_programs(1) - 1)
    def _finalize():
        scores = acc_ref[...] + b_ref[0]                     # (TB, G)
        scores_ref[...] = scores[None].astype(scores_ref.dtype)

        # Grouped softmax cross-entropy with target label 0:
        #   loss_b = logsumexp(scores[b, :]) - scores[b, 0]
        m = jnp.max(scores, axis=-1, keepdims=True)          # (TB, 1)
        lse = m + jnp.log(jnp.sum(jnp.exp(scores - m), axis=-1, keepdims=True))
        gloss_ref[...] = (lse - scores[:, :1])[None]         # (1, TB, 1)


# ---------------------------------------------------------------------------
# Tile selection: biggest input block that fits the (double-buffered) budget.
# ---------------------------------------------------------------------------
def _choose_tiles(B, G, S, H, itemsize, block_budget_bytes):
    """Largest (TILE_B, TILE_S) with TILE_B | B, TILE_S | S,
    (TILE_S % 8 == 0 or TILE_S == S), whose input block fits the budget."""
    per_buffer = max(block_budget_bytes // 2, 1)   # Pallas double-buffers inputs
    ts_cands = [t for t in range(S, 0, -1) if S % t == 0 and (t % 8 == 0 or t == S)]
    tb_cands = [t for t in range(B, 0, -1) if B % t == 0]
    best, best_vol = (1, ts_cands[-1]), 0
    for tb in tb_cands:
        for ts in ts_cands:
            if tb * G * ts * H * itemsize <= per_buffer:
                vol = tb * ts
                if vol > best_vol:
                    best, best_vol = (tb, ts), vol
    # TODO(synk): for extreme G*H also tile the hidden axis; not needed here.
    return best


# ---------------------------------------------------------------------------
# CrossEncoder forward
# ---------------------------------------------------------------------------
def cross_encoder_forward(hidden_states, w, b, *, batch_size, group_size,
                          training=True,
                          block_budget_bytes=8 * 1024 * 1024,
                          vmem_limit_bytes=None):
    """hidden_states: (B*G, S, H) encoder activations (bf16 recommended)
       w: (H,) classifier weight, b: () classifier bias.
       Returns (loss, logits) in training mode, logits otherwise; logits are
       shaped (B*G, 1) to match the PyTorch module's ranker_out.logits.
    """
    B, G = batch_size, group_size
    N, S, H = hidden_states.shape
    assert N == B * G, "hidden_states leading dim must equal batch*group"

    x = hidden_states.reshape(B, G, S, H)                      # free view in XLA
    w_scaled = (w.astype(jnp.float32) / S).reshape(1, 1, H)    # fold mean's 1/S
    b_arr = jnp.asarray(b, dtype=jnp.float32).reshape(1)       # scalar -> SMEM

    tile_b, tile_s = _choose_tiles(B, G, S, H,
                                   hidden_states.dtype.itemsize,
                                   block_budget_bytes)
    grid = (B // tile_b, S // tile_s)

    compiler_params = pltpu.CompilerParams(
        # batch axis: independent tiles (megacore sharding on v7x);
        # sequence axis: reduction with a resident f32 accumulator.
        dimension_semantics=("parallel", "arbitrary"),
        vmem_limit_bytes=vmem_limit_bytes,
    )

    scores_tiled, gloss_tiled = pl.pallas_call(
        _ce_head_kernel,
        out_shape=(
            jax.ShapeDtypeStruct((grid[0], tile_b, G), jnp.float32),
            jax.ShapeDtypeStruct((grid[0], tile_b, 1), jnp.float32),
        ),
        grid_spec=pltpu.PrefetchScalarGridSpec(
            num_scalar_prefetch=0,
            grid=grid,
            in_specs=[
                pl.BlockSpec((tile_b, G, tile_s, H), lambda i, s: (i, 0, s, 0)),
                pl.BlockSpec((1, 1, H), lambda i, s: (0, 0, 0)),
                pl.BlockSpec(memory_space=pltpu.MemorySpace.SMEM),
            ],
            out_specs=[
                pl.BlockSpec((1, tile_b, G), lambda i, s: (i, 0, 0)),
                pl.BlockSpec((1, tile_b, 1), lambda i, s: (i, 0, 0)),
            ],
            scratch_shapes=[pltpu.VMEM((tile_b, G), jnp.float32)],
        ),
        compiler_params=compiler_params,
    )(x, w_scaled, b_arr)

    scores = scores_tiled.reshape(B, G)
    logits = scores.reshape(N, 1)          # matches PyTorch ranker_out.logits
    if not training:
        return logits
    # Final mean over B per-group losses: B scalars, kept in plain JAX so the
    # batch grid axis can remain "parallel" (fuses into the surrounding jit).
    loss = jnp.mean(gloss_tiled)
    return loss, logits


if __name__ == "__main__":
    # Small shapes consistent with the module:
    #   per_device_train_batch_size B = 2, train_group_size G = 4,
    #   seq S = 16, hidden H = 128  ->  N = B*G = 8 scored (query, doc) pairs.
    B, G, S, H = 2, 4, 16, 128
    N = B * G

    key = jax.random.PRNGKey(0)
    k_x, k_w, k_b = jax.random.split(key, 3)

    # Activations streamed as bf16 (HBM-traffic dominant tensor); params f32.
    hidden_states = jax.random.normal(
        k_x, (N, S, H), dtype=jnp.float32).astype(jnp.bfloat16)
    w = jax.random.normal(k_w, (H,), dtype=jnp.float32) * 0.05
    b = jax.random.normal(k_b, (), dtype=jnp.float32) * 0.01

    loss, logits = cross_encoder_forward(
        hidden_states, w, b, batch_size=B, group_size=G, training=True)
    jax.block_until_ready((loss, logits))

    # Pure-JAX reference from the same bf16 activations (f32 math).
    hs = hidden_states.astype(jnp.float32)
    pooled_ref = hs.mean(axis=1)                       # (N, H)
    logits_ref = pooled_ref @ w + b                    # (N,)
    scores_ref = logits_ref.reshape(B, G)
    loss_ref = jnp.mean(
        jax.scipy.special.logsumexp(scores_ref, axis=-1) - scores_ref[:, 0])

    assert jnp.allclose(logits[:, 0], logits_ref, atol=1e-4, rtol=1e-3)
    assert jnp.allclose(loss, loss_ref, atol=1e-4, rtol=1e-3)

    # Exercise the tiled path (grid = (2, 2): batch tiling + sequence-reduction
    # accumulator) by shrinking the VMEM block budget.
    loss2, logits2 = cross_encoder_forward(
        hidden_states, w, b, batch_size=B, group_size=G, training=True,
        block_budget_bytes=16 * 1024)
    jax.block_until_ready((loss2, logits2))
    assert jnp.allclose(logits2[:, 0], logits_ref, atol=1e-4, rtol=1e-3)
    assert jnp.allclose(loss2, loss_ref, atol=1e-4, rtol=1e-3)

    # Eval branch (no loss).
    logits_eval = cross_encoder_forward(
        hidden_states, w, b, batch_size=B, group_size=G, training=False)
    jax.block_until_ready(logits_eval)
    assert jnp.allclose(logits_eval[:, 0], logits_ref, atol=1e-4, rtol=1e-3)

    print("KERNEL_OK")
</pallas_src>

<mosaic_0001>
module attributes {stable_mosaic.version = 11 : i64} {
  func.func @_ce_head_kernel(%arg0: i32, %arg1: i32, %arg2: memref<2x4x16x128xbf16, #tpu.memory_space<vmem>>, %arg3: memref<1x1x128xf32, #tpu.memory_space<vmem>>, %arg4: memref<1xf32, #tpu.memory_space<smem>>, %arg5: memref<1x2x4xf32, #tpu.memory_space<vmem>>, %arg6: memref<1x2x1xf32, #tpu.memory_space<vmem>>, %arg7: memref<2x4xf32, #tpu.memory_space<vmem>>) attributes {dimension_semantics = [#tpu.dimension_semantics<parallel>, #tpu.dimension_semantics<arbitrary>], iteration_bounds = array<i64: 1, 1>, scalar_prefetch = 0 : i64, scratch_operands = 1 : i64, tpu.core_type = #tpu.core_type<tc>, window_params = [{transform_indices = @transform_0, window_bounds = array<i64: 2, 4, 16, 128>}, {pipeline_mode = #tpu.pipeline_mode<synchronous>, transform_indices = @transform_1, window_bounds = array<i64: 1, 1, 128>}, {transform_indices = @transform_2, window_bounds = array<i64: 1>}, {transform_indices = @transform_3, window_bounds = array<i64: 1, 2, 4>}, {transform_indices = @transform_4, window_bounds = array<i64: 1, 2, 1>}]} {
    %c0_i32 = arith.constant 0 : i32
    %0 = arith.cmpi eq, %arg1, %c0_i32 : i32
    %1 = arith.extui %0 : i1 to i32
    %c0_i32_0 = arith.constant 0 : i32
    %2 = arith.cmpi ne, %1, %c0_i32_0 : i32
    scf.if %2 {
      %cst_14 = arith.constant 0.000000e+00 : f32
      %16 = vector.broadcast %cst_14 : f32 to vector<2x4xf32>
      %c0_15 = arith.constant 0 : index
      %c0_16 = arith.constant 0 : index
      %17 = vector.load %arg7[%c0_15, %c0_16] : memref<2x4xf32, #tpu.memory_space<vmem>>, vector<2x4xf32>
      tpu.vector_store %arg7[%c0_15, %c0_16], %16 {strides = array<i32>} : memref<2x4xf32, #tpu.memory_space<vmem>>, vector<2x4xf32>,
    } else {
    }
    %c0 = arith.constant 0 : index
    %c0_1 = arith.constant 0 : index
    %c0_2 = arith.constant 0 : index
    %c0_3 = arith.constant 0 : index
    %3 = vector.load %arg2[%c0, %c0_1, %c0_2, %c0_3] : memref<2x4x16x128xbf16, #tpu.memory_space<vmem>>, vector<2x4x16x128xbf16>
    %4 = arith.extf %3 : vector<2x4x16x128xbf16> to vector<2x4x16x128xf32>
    %cst = arith.constant dense<0.000000e+00> : vector<2x4x128xf32>
    %5 = vector.multi_reduction <add>, %4, %cst [2] : vector<2x4x16x128xf32> to vector<2x4x128xf32>
    %c0_4 = arith.constant 0 : index
    %c0_5 = arith.constant 0 : index
    %c0_6 = arith.constant 0 : index
    %6 = vector.load %arg3[%c0_4, %c0_5, %c0_6] : memref<1x1x128xf32, #tpu.memory_space<vmem>>, vector<1x1x128xf32>
    %c0_7 = arith.constant 0 : index
    %c0_8 = arith.constant 0 : index
    %7 = vector.load %arg7[%c0_7, %c0_8] : memref<2x4xf32, #tpu.memory_space<vmem>>, vector<2x4xf32>
    %8 = vector.broadcast %6 : vector<1x1x128xf32> to vector<2x4x128xf32>
    %9 = arith.mulf %5, %8 : vector<2x4x128xf32>
    %cst_9 = arith.constant dense<0.000000e+00> : vector<2x4xf32>
    %10 = vector.multi_reduction <add>, %9, %cst_9 [2] : vector<2x4x128xf32> to vector<2x4xf32>
    %11 = arith.addf %7, %10 : vector<2x4xf32>
    %c0_10 = arith.constant 0 : index
    %c0_11 = arith.constant 0 : index
    %12 = vector.load %arg7[%c0_10, %c0_11] : memref<2x4xf32, #tpu.memory_space<vmem>>, vector<2x4xf32>
    tpu.vector_store %arg7[%c0_10, %c0_11], %11 {strides = array<i32>} : memref<2x4xf32, #tpu.memory_space<vmem>>, vector<2x4xf32>,
    %c0_i32_12 = arith.constant 0 : i32
    %13 = arith.cmpi eq, %arg1, %c0_i32_12 : i32
    %14 = arith.extui %13 : i1 to i32
    %c0_i32_13 = arith.constant 0 : i32
    %15 = arith.cmpi ne, %14, %c0_i32_13 : i32
    scf.if %15 {
      %c0_14 = arith.constant 0 : index
      %c0_15 = arith.constant 0 : index
      %16 = vector.load %arg7[%c0_14, %c0_15] : memref<2x4xf32, #tpu.memory_space<vmem>>, vector<2x4xf32>
      %c0_16 = arith.constant 0 : index
      %17 = memref.load %arg4[%c0_16] : memref<1xf32, #tpu.memory_space<smem>>
      %18 = vector.broadcast %17 : f32 to vector<2x4xf32>
      %19 = arith.addf %16, %18 : vector<2x4xf32>
      %20 = vector.shape_cast %19 : vector<2x4xf32> to vector<1x2x4xf32>
      %c0_17 = arith.constant 0 : index
      %c0_18 = arith.constant 0 : index
      %c0_19 = arith.constant 0 : index
      %21 = vector.load %arg5[%c0_17, %c0_18, %c0_19] : memref<1x2x4xf32, #tpu.memory_space<vmem>>, vector<1x2x4xf32>
      tpu.vector_store %arg5[%c0_17, %c0_18, %c0_19], %20 {strides = array<i32>} : memref<1x2x4xf32, #tpu.memory_space<vmem>>, vector<1x2x4xf32>,
      %cst_20 = arith.constant dense<0xFF800000> : vector<2xf32>
      %22 = vector.multi_reduction <maximumf>, %19, %cst_20 [1] : vector<2x4xf32> to vector<2xf32>
      %23 = vector.shape_cast %22 : vector<2xf32> to vector<2x1xf32>
      %24 = vector.broadcast %23 : vector<2x1xf32> to vector<2x4xf32>
      %25 = arith.subf %19, %24 : vector<2x4xf32>
      %26 = math.exp %25 : vector<2x4xf32>
      %cst_21 = arith.constant dense<0.000000e+00> : vector<2xf32>
      %27 = vector.multi_reduction <add>, %26, %cst_21 [1] : vector<2x4xf32> to vector<2xf32>
      %28 = vector.shape_cast %27 : vector<2xf32> to vector<2x1xf32>
      %29 = math.log %28 : vector<2x1xf32>
      %30 = arith.addf %23, %29 : vector<2x1xf32>
      %31 = vector.extract_strided_slice %19 {offsets = [0, 0], sizes = [2, 1], strides = [1, 1]} : vector<2x4xf32> to vector<2x1xf32>
      %32 = arith.subf %30, %31 : vector<2x1xf32>
      %33 = vector.shape_cast %32 : vector<2x1xf32> to vector<1x2x1xf32>
      %c0_22 = arith.constant 0 : index
      %c0_23 = arith.constant 0 : index
      %c0_24 = arith.constant 0 : index
      %34 = vector.load %arg6[%c0_22, %c0_23, %c0_24] : memref<1x2x1xf32, #tpu.memory_space<vmem>>, vector<1x2x1xf32>
      tpu.vector_store %arg6[%c0_22, %c0_23, %c0_24], %33 {strides = array<i32>} : memref<1x2x1xf32, #tpu.memory_space<vmem>>, vector<1x2x1xf32>,
    } else {
    }
    return
  }
  func.func @transform_0(%arg0: i32, %arg1: i32) -> (i32, i32, i32, i32) {
    %c0_i32 = arith.constant 0 : i32
    %c0_i32_0 = arith.constant 0 : i32
    %c0_i32_1 = arith.constant 0 : i32
    return %arg0, %c0_i32, %arg1, %c0_i32_0 : i32, i32, i32, i32
  }
  func.func @transform_1(%arg0: i32, %arg1: i32) -> (i32, i32, i32) {
    %c0_i32 = arith.constant 0 : i32
    %c0_i32_0 = arith.constant 0 : i32
    %c0_i32_1 = arith.constant 0 : i32
    %c0_i32_2 = arith.constant 0 : i32
    return %c0_i32, %c0_i32_0, %c0_i32_1 : i32, i32, i32
  }
  func.func @transform_2(%arg0: i32, %arg1: i32) -> i32 {
    %c0_i32 = arith.constant 0 : i32
    %c0_i32_0 = arith.constant 0 : i32
    return %c0_i32 : i32
  }
  func.func @transform_3(%arg0: i32, %arg1: i32) -> (i32, i32, i32) {
    %c0_i32 = arith.constant 0 : i32
    %c0_i32_0 = arith.constant 0 : i32
    %c0_i32_1 = arith.constant 0 : i32
    return %arg0, %c0_i32, %c0_i32_0 : i32, i32, i32
  }
  func.func @transform_4(%arg0: i32, %arg1: i32) -> (i32, i32, i32) {
    %c0_i32 = arith.constant 0 : i32
    %c0_i32_0 = arith.constant 0 : i32
    %c0_i32_1 = arith.constant 0 : i32
    return %arg0, %c0_i32, %c0_i32_0 : i32, i32, i32
  }
}

</mosaic_0001>

<llo_original>
// kernel: tpu_custom_call.1
$region0: #{tpu_custom_call.1}
  #allocation0 [shape = 'u32[]', space=smem, size = 0x4, offset = 0x4, fixed_abs, tag = 'smem constant byte address 0x4 - core index']
  #allocation1 [shape = 'u32[144,128]{1,0:T(1,128)}', space=vmem, size = 0x12000, scoped, tag = 'internal scratch']
  #allocation2 [shape = 'f32[2,4]{1,0:T(2,128)}', space=vmem, size = 0x400, scoped, tag = 'scratch operand']
  #allocation3 [shape = 'f32[1]{0:T(128)S(6)}', space=smem, size = 0x200, scoped, tag = 'scoped memory for tpu_custom_call.1']
  %s0 = inlined_call_operand.hbm [shape: bf16[2,4,16,128], index: 0, kind: input, shape index: {}]
  %s1 = inlined_call_operand.vmem [shape: f32[1,1,128], index: 1, kind: input, shape index: {}]
  %s2 = inlined_call_operand.<no memory space> [shape: f32[1], index: 2, kind: input, shape index: {}]
  %s3 = inlined_call_operand.hbm [shape: f32[1,2,4], index: 3, kind: output, shape index: {0}]
  %s4 = inlined_call_operand.vmem [shape: f32[1,2,1], index: 4, kind: output, shape index: {1}]
  %5 = xla_tuple %s3, %s4
  %s6 = sld [smem:[#allocation0]]
  $region42: #{tpu_custom_call.1} parent=0
    _
  %s8 = ssub.s32 1, %s6
  %s9 = scalar_select 0, %s8, %s6
  %10 = sst [smem:[#allocation3]] %s2
  $region1: #{tpu_custom_call.1} parent=0
    #allocation4 [shape = 'u8[32768]{0}', space=vmem, size = 0x8000, scoped, tag = 'input window, operand 0, single buffered']
    #allocation5 [shape = 's32[1]{0}', space=sflag, size = 0x4, scoped, tag = 'scoped memory for tpu_custom_call.1']
    #allocation6 [shape = 's32[1]{0}', space=sflag, size = 0x4, scoped, tag = 'scoped memory for tpu_custom_call.1']
    #allocation7 [shape = 'u8[1024]{0}', space=vmem, size = 0x400, scoped, tag = 'output window, operand 0, single buffered']
    %11 = vsyncpa [#allocation5], 0
    %12 = vsyncpa [#allocation6], 0
    // Predicated region
    $region2: #{tpu_custom_call.1} parent=1 // pred_check
      _
    $region3: #{tpu_custom_call.1} parent=1 // pred_check_branch
      %14 = sbr.rel (0) target = $region5
    $region4: #{tpu_custom_call.1} parent=1 // pred_region
      %s16 = ssub.s32 1024, 1024
      %17 = vsyncadd [#allocation5], %s16
      %s18 = sshll.u32 [#allocation4], 4
      %s19 = int_to_ptr.vmem [resolvable:$true] %s18
      %24 = dma.hbm_to_vmem [thread:$0]  %s0, 1024, %s19, [#allocation5], 64, 64, 4
    $region5: #{tpu_custom_call.1} parent=1 // pred_fallthru
      _
    // Predicated region
    $region6: #{tpu_custom_call.1} parent=1 // pred_check
      _
    $region7: #{tpu_custom_call.1} parent=1 // pred_check_branch
      %26 = sbr.rel (0) target = $region9
    $region8: #{tpu_custom_call.1} parent=1 // pred_region
      _
    $region9: #{tpu_custom_call.1} parent=1 // pred_fallthru
      _
    // Predicated region
    $region10: #{tpu_custom_call.1} parent=1 // pred_check
      _
    $region11: #{tpu_custom_call.1} parent=1 // pred_check_branch
      %28 = sbr.rel (0) target = $region13
    $region12: #{tpu_custom_call.1} parent=1 // pred_region
      _
    $region13: #{tpu_custom_call.1} parent=1 // pred_fallthru
      _
    // Predicated region
    $region14: #{tpu_custom_call.1} parent=1 // pred_check
      _
    $region15: #{tpu_custom_call.1} parent=1 // pred_check_branch
      %30 = sbr.rel (0) target = $region17
    $region16: #{tpu_custom_call.1} parent=1 // pred_region
      %31 = dma.done [#allocation5], 1024
    $region17: #{tpu_custom_call.1} parent=1 // pred_fallthru
      _
    %p32 = scmp.eq.s32.totalorder 0, 0
    // Predicated region
    $region18: #{tpu_custom_call.1} parent=1 // pred_check
      %p33 = pneg %p32
    $region19: #{tpu_custom_call.1} parent=1 // pred_check_branch
      %35 = sbr.rel (%p33) target = $region21
    $region20: #{tpu_custom_call.1} parent=1 // pred_region
      %vm36 = vcmask 25600
      %37 = vst.msk [vmem:[#allocation2] sm:$0x3] %vm36, 0.0
    $region21: #{tpu_custom_call.1} parent=1 // pred_fallthru
      _
    %v38 = vld [vmem:[#allocation4] sm:$0xf]
    %v39 = vld [vmem:[#allocation4 + $0x4] sm:$0xf]
    %v40 = vld [vmem:[#allocation4 + $0x8] sm:$0xf]
    %v41 = vld [vmem:[#allocation4 + $0xc] sm:$0xf]
    %v42 = vld [vmem:[#allocation4 + $0x10] sm:$0xf]
    %v43 = vld [vmem:[#allocation4 + $0x14] sm:$0xf]
    %v44 = vld [vmem:[#allocation4 + $0x18] sm:$0xf]
    %v45 = vld [vmem:[#allocation4 + $0x1c] sm:$0xf]
    %v46 = vld [vmem:[#allocation4 + $0x20] sm:$0xf]
    %v47 = vld [vmem:[#allocation4 + $0x24] sm:$0xf]
    %v48 = vld [vmem:[#allocation4 + $0x28] sm:$0xf]
    %v49 = vld [vmem:[#allocation4 + $0x2c] sm:$0xf]
    %v50 = vld [vmem:[#allocation4 + $0x30] sm:$0xf]
    %v51 = vld [vmem:[#allocation4 + $0x34] sm:$0xf]
    %v52 = vld [vmem:[#allocation4 + $0x38] sm:$0xf]
    %v53 = vld [vmem:[#allocation4 + $0x3c] sm:$0xf]
    %v54 = vunpack.c.l.bf16 %v38
    %v55 = vunpack.c.l.bf16 %v39
    %v56 = vunpack.c.l.bf16 %v40
    %v57 = vunpack.c.l.bf16 %v41
    %v58 = vunpack.c.l.bf16 %v42
    %v59 = vunpack.c.l.bf16 %v43
    %v60 = vunpack.c.l.bf16 %v44
    %v61 = vunpack.c.l.bf16 %v45
    %v62 = vunpack.c.l.bf16 %v46
    %v63 = vunpack.c.l.bf16 %v47
    %v64 = vunpack.c.l.bf16 %v48
    %v65 = vunpack.c.l.bf16 %v49
    %v66 = vunpack.c.l.bf16 %v50
    %v67 = vunpack.c.l.bf16 %v51
    %v68 = vunpack.c.l.bf16 %v52
    %v69 = vunpack.c.l.bf16 %v53
    %v70 = vadd.f32 %v54, %v55
    %v71 = vrot.slane %v70, 4
    %v72 = vadd.f32 %v70, %v71
    %v73 = vrot.slane %v72, 2
    %v74 = vadd.f32 %v72, %v73
    %v75 = vrot.slane %v74, 1
    %v76 = vadd.f32 %v74, %v75
    %v77 = vadd.f32 %v56, %v57
    %v78 = vrot.slane %v77, 4
    %v79 = vadd.f32 %v77, %v78
    %v80 = vrot.slane %v79, 2
    %v81 = vadd.f32 %v79, %v80
    %v82 = vrot.slane %v81, 1
    %v83 = vadd.f32 %v81, %v82
    %v84 = vadd.f32 %v58, %v59
    %v85 = vrot.slane %v84, 4
    %v86 = vadd.f32 %v84, %v85
    %v87 = vrot.slane %v86, 2
    %v88 = vadd.f32 %v86, %v87
    %v89 = vrot.slane %v88, 1
    %v90 = vadd.f32 %v88, %v89
    %v91 = vadd.f32 %v60, %v61
    %v92 = vrot.slane %v91, 4
    %v93 = vadd.f32 %v91, %v92
    %v94 = vrot.slane %v93, 2
    %v95 = vadd.f32 %v93, %v94
    %v96 = vrot.slane %v95, 1
    %v97 = vadd.f32 %v95, %v96
    %v98 = vadd.f32 %v62, %v63
    %v99 = vrot.slane %v98, 4
    %v100 = vadd.f32 %v98, %v99
    %v101 = vrot.slane %v100, 2
    %v102 = vadd.f32 %v100, %v101
    %v103 = vrot.slane %v102, 1
    %v104 = vadd.f32 %v102, %v103
    %v105 = vadd.f32 %v64, %v65
    %v106 = vrot.slane %v105, 4
    %v107 = vadd.f32 %v105, %v106
    %v108 = vrot.slane %v107, 2
    %v109 = vadd.f32 %v107, %v108
    %v110 = vrot.slane %v109, 1
    %v111 = vadd.f32 %v109, %v110
    %v112 = vadd.f32 %v66, %v67
    %v113 = vrot.slane %v112, 4
    %v114 = vadd.f32 %v112, %v113
    %v115 = vrot.slane %v114, 2
    %v116 = vadd.f32 %v114, %v115
    %v117 = vrot.slane %v116, 1
    %v118 = vadd.f32 %v116, %v117
    %v119 = vadd.f32 %v68, %v69
    %v120 = vrot.slane %v119, 4
    %v121 = vadd.f32 %v119, %v120
    %v122 = vrot.slane %v121, 2
    %v123 = vadd.f32 %v121, %v122
    %v124 = vrot.slane %v123, 1
    %v125 = vadd.f32 %v123, %v124
    %v126 = vld [vmem:[%s1] sm:$0x1]
    %v127 = vld [vmem:[#allocation2] sm:$0x3]
    %v129 = vlaneseq
    %v130 = vshrl.u32 %v129, 7
    %v131 = vsub.s32 0, %v130
    %v132 = vrot.slane %v126, %v131
    %v134 = vmul.f32 %v76, %v132
    %v135 = vmul.f32 %v83, %v132
    %v136 = vmul.f32 %v90, %v132
    %v137 = vmul.f32 %v97, %v132
    %v138 = vmul.f32 %v104, %v132
    %v139 = vmul.f32 %v111, %v132
    %v140 = vmul.f32 %v118, %v132
    %v141 = vmul.f32 %v125, %v132
    %v150 = vrot.slane %v135, 7
    %vm151 = vcmask 1041409
    %v152 = vsel %vm151, %v150, %v134
    %v153 = vrot.slane %v136, 6
    %vm154 = vcmask 1042434
    %v155 = vsel %vm154, %v153, %v152
    %v156 = vrot.slane %v137, 5
    %vm157 = vcmask 1043459
    %v158 = vsel %vm157, %v156, %v155
    %v159 = vrot.slane %v139, 7
    %v160 = vsel %vm151, %v159, %v138
    %v161 = vrot.slane %v140, 6
    %v162 = vsel %vm154, %v161, %v160
    %v163 = vrot.slane %v141, 5
    %v164 = vsel %vm157, %v163, %v162
    %vm167 = vcmask 1043456
    %v168 = vsel %vm167, %v158, 0.0
    %169 = vadd.xlane.f32.xlu0 %v168
    %v170 = vpop.xlane.xlu0 %169
    %v171 = vsel %vm167, %v164, 0.0
    %172 = vadd.xlane.f32.xlu0 %v171
    %v173 = vpop.xlane.xlu0 %172
    %v176 = vlaneseq
    %v177 = vand.u32 %v176, 127
    %v178 = vlaneseq
    %v179 = vshrl.u32 %v178, 7
    %v180 = vsub.s32 %v177, %v179
    %v181 = vrot.slane %v170, %v180
    %v182 = vlaneseq
    %v183 = vshrl.u32 %v182, 7
    %v184 = vsub.s32 %v177, %v183
    %v185 = vrot.slane %v173, %v184
    %v186 = vsel %vm151, %v185, %v181
    %v188 = vadd.f32 %v127, %v186
    %vm189 = vcmask 25600
    %190 = vst.msk [vmem:[#allocation2] sm:$0x3] %vm189, %v188
    // Predicated region
    $region22: #{tpu_custom_call.1} parent=1 // pred_check
      %p191 = pneg %p32
    $region23: #{tpu_custom_call.1} parent=1 // pred_check_branch
      %193 = sbr.rel (%p191) target = $region25
    $region24: #{tpu_custom_call.1} parent=1 // pred_region
      %v194 = vld [vmem:[#allocation2] sm:$0x3]
      %s195 = sld [smem:[#allocation3]]
      %v196 = vstv %s195
      %v197 = vadd.f32 %v194, %v196
      %198 = vst.msk [vmem:[#allocation7] sm:$0x3] %vm189, %v197
      %v199 = vsel %vm189, %v197, -inf
      %200 = vmax.xlane.f32.xlu0 %v199
      %v201 = vpop.xlane.xlu0 %200
      %v202 = vsub.f32 %v197, %v201
      %v203 = vmul.f32 %v202, 1.442695
      %v204 = vpow.pop %v203
      %v205 = vsel %vm189, %v204, 0.0
      %206 = vadd.xlane.f32.xlu0 %v205
      %v207 = vpop.xlane.xlu0 %206
      %v208 = vlog2.pop %v207
      %v209 = vmul.f32 %v208, 0.6931472
      %v210 = vadd.f32 %v201, %v209
      %v211 = vsub.f32 %v210, %v197
      %vm212 = vcmask 1024
      %213 = vst.msk [vmem:[%s4] sm:$0x3] %vm212, %v211
    $region25: #{tpu_custom_call.1} parent=1 // pred_fallthru
      _
    // Predicated region
    $region26: #{tpu_custom_call.1} parent=1 // pred_check
      _
    $region27: #{tpu_custom_call.1} parent=1 // pred_check_branch
      %215 = sbr.rel (0) target = $region29
    $region28: #{tpu_custom_call.1} parent=1 // pred_region
      %s217 = ssub.s32 32, 32
      %218 = vsyncadd [#allocation6], %s217
      %s220 = sshll.u32 [#allocation7], 4
      %s221 = int_to_ptr.vmem [resolvable:$true] %s220
      %223 = dma.vmem_to_hbm [thread:$0]  %s221, 32, %s3, [#allocation6]
    $region29: #{tpu_custom_call.1} parent=1 // pred_fallthru
      _
    // Predicated region
    $region30: #{tpu_custom_call.1} parent=1 // pred_check
      _
    $region31: #{tpu_custom_call.1} parent=1 // pred_check_branch
      %225 = sbr.rel (0) target = $region33
    $region32: #{tpu_custom_call.1} parent=1 // pred_region
      _
    $region33: #{tpu_custom_call.1} parent=1 // pred_fallthru
      _
    // Predicated region
    $region34: #{tpu_custom_call.1} parent=1 // pred_check
      _
    $region35: #{tpu_custom_call.1} parent=1 // pred_check_branch
      %227 = sbr.rel (0) target = $region37
    $region36: #{tpu_custom_call.1} parent=1 // pred_region
      %228 = dma.done [#allocation6], 32
    $region37: #{tpu_custom_call.1} parent=1 // pred_fallthru
      _
    // Predicated region
    $region38: #{tpu_custom_call.1} parent=1 // pred_check
      _
    $region39: #{tpu_custom_call.1} parent=1 // pred_check_branch
      %230 = sbr.rel (0) target = $region41
    $region40: #{tpu_custom_call.1} parent=1 // pred_region
      _
    $region41: #{tpu_custom_call.1} parent=1 // pred_fallthru
      _
    %231 = vsyncpa [#allocation5], 1
    %232 = vsyncpa [#allocation6], 1

</llo_original>
